<compile_context>
chip_gen: v5e
topology: v5e:2x2
jax: 0.10.0
libtpu: 0.0.40
codegen_flags: <defaults>
</compile_context>

<pallas_src>
import functools

import jax
import jax.numpy as jnp
from jax.experimental import pallas as pl
from jax.experimental.pallas import tpu as pltpu


# ---------------------------------------------------------------------------
# Kernel
# ---------------------------------------------------------------------------
def _random_transform_kernel(wy_ref, wxt_ref, x_ref, o_ref, *, c_blk, src_h,
                             tgt, compute_dtype):
    # x_ref block is (1, c_blk*H, W): all channels of this tile already stacked
    # along the sublane axis (wrapper passed x reshaped to (N, C*H, W)).
    xr = x_ref[0]                                            # (c_blk*H, W)
    wxt = wxt_ref[0]                                         # (W, T)

    # Stage 1: one merged MXU matmul, M = c_blk*H.
    a = jnp.dot(xr, wxt, preferred_element_type=jnp.float32)  # (c_blk*H, T) f32

    # Stage 2: batched matmul over channels (flash-attention 'bqk,bkd' pattern).
    a3 = a.reshape(c_blk, src_h, tgt).astype(compute_dtype)   # (c, H, T)
    wy_b = jnp.broadcast_to(wy_ref[...], (c_blk, tgt, src_h))  # (c, T, H)
    out3 = jnp.einsum("cih,chj->cij", wy_b, a3,
                      preferred_element_type=jnp.float32)      # (c, T, T) f32

    o_ref[0] = out3.astype(o_ref.dtype)


# ---------------------------------------------------------------------------
# Wrapper helpers
# ---------------------------------------------------------------------------
def _vmem_capacity_bytes():
    try:
        return int(pltpu.get_tpu_info().vmem_capacity_bytes)
    except Exception:  # pragma: no cover - conservative fallback
        return 128 << 20


def _pad2(rows, cols):
    """Bytes-of-elements after (8, 128) tile padding of a 2D trailing shape."""
    return ((rows + 7) // 8 * 8) * ((cols + 127) // 128 * 128)


def _pick_channel_tile(c, h, w, t, x_isz, w_isz, budget_bytes):
    """Largest divisor of C whose full double-buffered + intermediate VMEM
    footprint fits the per-generation budget (v7x 64 MiB vs v5e/v6e 128 MiB)."""

    def total(cb):
        x_blk = _pad2(cb * h, w) * x_isz          # input block
        o_blk = cb * _pad2(t, t) * x_isz          # output block
        acc = _pad2(cb * h, t) * 4                # stage-1 f32 accumulator
        a3 = cb * _pad2(h, t) * x_isz             # stage-2 lhs-side operand
        wyb = cb * _pad2(t, h) * w_isz            # broadcast Wy
        o3 = cb * _pad2(t, t) * 4                 # stage-2 f32 result
        wts = 2 * (_pad2(t, h) + _pad2(w, t)) * w_isz
        return 2 * (x_blk + o_blk) + acc + a3 + wyb + o3 + wts

    best = 1
    for cb in range(1, c + 1):
        if c % cb:
            continue
        # (8,128) rule: second-to-last block dim of the (N, C*H, W) input must
        # be a multiple of 8 unless it spans the whole axis.
        if cb != c and (cb * h) % 8:
            continue
        if total(cb) <= budget_bytes:
            best = cb
    return best


def _build_weights(randgen, *, n, src_h, src_w, tgt, k, delta, fliplr, flipud,
                   dtype):
    """Per-sample row/column interpolation matrices (shift + flip folded in).

    Out-of-range bilinear taps simply match no index -> weight 0, which is
    exactly grid_sample's padding_mode='zeros'.
    """
    r = jnp.asarray(randgen, jnp.float32)
    step = (k + 1.0) / (tgt - 1.0)                 # torch.linspace(-1, k, tgt)
    base = -1.0 + jnp.arange(tgt, dtype=jnp.float32) * step

    x_shift = (r[:, 0] - 0.5) * (2.0 * delta)
    y_shift = (r[:, 1] - 0.5) * (2.0 * delta)
    ones = jnp.ones((n,), jnp.float32)
    sx = jnp.where(r[:, 2] > 0.5, -1.0, 1.0) if fliplr else ones
    sy = jnp.where(r[:, 3] > 0.5, -1.0, 1.0) if flipud else ones

    gx = sx[:, None] * (base[None, :] + x_shift[:, None])      # (N, T)
    gy = sy[:, None] * (base[None, :] + y_shift[:, None])      # (N, T)
    px = (gx + 1.0) * (0.5 * (src_w - 1.0))                    # align_corners=True
    py = (gy + 1.0) * (0.5 * (src_h - 1.0))

    def interp_matrix(p, size):                                # (N, T) -> (N, T, size)
        idx = jnp.arange(size, dtype=jnp.float32)[None, None, :]
        p0 = jnp.floor(p)[..., None]
        f = (p - jnp.floor(p))[..., None]
        return (jnp.where(idx == p0, 1.0 - f, 0.0)
                + jnp.where(idx == p0 + 1.0, f, 0.0))

    wy = interp_matrix(py, src_h)                              # (N, T, H)
    wx = interp_matrix(px, src_w)                              # (N, T, W)
    wxt = jnp.swapaxes(wx, 1, 2)                               # (N, W, T)
    return wy.astype(dtype), wxt.astype(dtype)


# ---------------------------------------------------------------------------
# Public entry point (== RandomTransform(...).forward(x, randgen))
# ---------------------------------------------------------------------------
def random_transform(x, randgen, *, target_size, shift=8, fliplr=True,
                     flipud=False):
    n, c, h, w = x.shape
    assert h == w, "module assumes a square source_size"
    assert target_size >= 2 and h >= 2
    assert jnp.issubdtype(x.dtype, jnp.floating), "grid_sample needs float input"

    tgt = int(target_size)
    k = float(target_size) / float(h)
    delta = float(shift) / float(h - 1)            # torch.linspace(0, 1, src)[shift]

    randgen = jnp.asarray(randgen, dtype=jnp.float32)
    assert randgen.shape == (n, 4)

    # Weights live in x.dtype so bf16 inputs use the MXU's native bf16 path.
    w_dtype = x.dtype
    wy, wxt = _build_weights(randgen, n=n, src_h=h, src_w=w, tgt=tgt, k=k,
                             delta=delta, fliplr=bool(fliplr),
                             flipud=bool(flipud), dtype=w_dtype)

    # Tile sizing from the actual chip's VMEM (v7x: 64 MiB, v5e/v6e: 128 MiB).
    phys_vmem = _vmem_capacity_bytes()
    vmem_limit = int(min(96 << 20, (phys_vmem * 3) // 4))
    budget = vmem_limit // 2
    c_blk = _pick_channel_tile(c, h, w, tgt, x.dtype.itemsize,
                               jnp.dtype(w_dtype).itemsize, budget)
    grid = (n, c // c_blk)

    # Free XLA reshape: channels stacked along the sublane axis so stage 1 is
    # one big matmul without any in-kernel relayout.
    x_r = x.reshape(n, c * h, w)

    kernel = functools.partial(_random_transform_kernel, c_blk=c_blk, src_h=h,
                               tgt=tgt, compute_dtype=x.dtype)

    flops = int(n * c * (2 * tgt * h * w + 2 * tgt * tgt * h))
    bytes_accessed = int(x.size * x.dtype.itemsize
                         + n * c * tgt * tgt * x.dtype.itemsize
                         + (wy.size + wxt.size) * jnp.dtype(w_dtype).itemsize)

    return pl.pallas_call(
        kernel,
        out_shape=jax.ShapeDtypeStruct((n, c, tgt, tgt), x.dtype),
        grid=grid,
        in_specs=[
            pl.BlockSpec((1, tgt, h), lambda b, ct: (b, 0, 0)),        # Wy
            pl.BlockSpec((1, w, tgt), lambda b, ct: (b, 0, 0)),        # WxT
            pl.BlockSpec((1, c_blk * h, w), lambda b, ct: (b, ct, 0)),  # x (N,C*H,W)
        ],
        out_specs=pl.BlockSpec((1, c_blk, tgt, tgt),
                               lambda b, ct: (b, ct, 0, 0)),
        compiler_params=pltpu.CompilerParams(
            dimension_semantics=("parallel", "parallel"),
            vmem_limit_bytes=vmem_limit),
        cost_estimate=pl.CostEstimate(flops=flops, transcendentals=0,
                                      bytes_accessed=bytes_accessed),
    )(wy, wxt, x_r)


# ---------------------------------------------------------------------------
# Pure-JAX gather-based reference (mirrors the PyTorch module)
# ---------------------------------------------------------------------------
def _reference(x, randgen, *, target_size, shift=8, fliplr=True, flipud=False):
    n, c, h, w = x.shape
    k = float(target_size) / float(h)
    delta = float(shift) / float(h - 1)
    tgt = int(target_size)
    step = (k + 1.0) / (tgt - 1.0)

    t = jnp.arange(tgt, dtype=jnp.float32)
    base = -1.0 + t * step

    x_shift = (randgen[:, 0] - 0.5) * (2.0 * delta)
    y_shift = (randgen[:, 1] - 0.5) * (2.0 * delta)
    sx = jnp.where(randgen[:, 2] > 0.5, -1.0, 1.0) if fliplr else jnp.ones((n,))
    sy = jnp.where(randgen[:, 3] > 0.5, -1.0, 1.0) if flipud else jnp.ones((n,))

    gx = sx[:, None] * (base[None, :] + x_shift[:, None])
    gy = sy[:, None] * (base[None, :] + y_shift[:, None])
    px = (gx + 1.0) * (0.5 * (w - 1.0))
    py = (gy + 1.0) * (0.5 * (h - 1.0))

    def sample_one(xb, px_b, py_b):
        x0 = jnp.floor(px_b); fx = px_b - x0
        y0 = jnp.floor(py_b); fy = py_b - y0

        def tap(yi, xi, wyv, wxv):
            vy = (yi >= 0) & (yi <= h - 1)
            vx = (xi >= 0) & (xi <= w - 1)
            yc = jnp.clip(yi, 0, h - 1).astype(jnp.int32)
            xc = jnp.clip(xi, 0, w - 1).astype(jnp.int32)
            vals = xb[:, yc[:, None], xc[None, :]]
            wgt = (jnp.where(vy, wyv, 0.0)[:, None]
                   * jnp.where(vx, wxv, 0.0)[None, :])
            return vals * wgt[None]

        return (tap(y0, x0, 1.0 - fy, 1.0 - fx)
                + tap(y0, x0 + 1.0, 1.0 - fy, fx)
                + tap(y0 + 1.0, x0, fy, 1.0 - fx)
                + tap(y0 + 1.0, x0 + 1.0, fy, fx))

    return jax.vmap(sample_one)(x, px, py).astype(x.dtype)


if __name__ == "__main__":
    key = jax.random.PRNGKey(0)
    kx, kr = jax.random.split(key)

    N, C, H, W = 2, 4, 16, 16
    TARGET, SHIFT = 16, 3

    x = jax.random.normal(kx, (N, C, H, W), dtype=jnp.float32)
    randgen = jax.random.uniform(kr, (N, 4), dtype=jnp.float32)  # torch.rand(N, 4)

    out = random_transform(x, randgen, target_size=TARGET, shift=SHIFT,
                           fliplr=True, flipud=False)
    out = jax.block_until_ready(out)
    assert out.shape == (N, C, TARGET, TARGET) and out.dtype == x.dtype

    expected = _reference(x, randgen, target_size=TARGET, shift=SHIFT,
                          fliplr=True, flipud=False)
    assert jnp.allclose(out, expected, atol=5e-2, rtol=5e-2), (
        float(jnp.max(jnp.abs(out - expected))))

    # Deterministically exercise both the flip and no-flip branches.
    for coin in (0.9, 0.1):
        rg = randgen.at[:, 2].set(coin)
        o = jax.block_until_ready(
            random_transform(x, rg, target_size=TARGET, shift=SHIFT))
        e = _reference(x, rg, target_size=TARGET, shift=SHIFT)
        assert jnp.allclose(o, e, atol=5e-2, rtol=5e-2)

    # bf16 fast path: weights and matmuls stay bf16, accumulation in f32.
    x_bf = x.astype(jnp.bfloat16)
    o_bf = jax.block_until_ready(
        random_transform(x_bf, randgen, target_size=TARGET, shift=SHIFT))
    assert o_bf.dtype == jnp.bfloat16
    e_bf = _reference(x_bf.astype(jnp.float32), randgen, target_size=TARGET,
                      shift=SHIFT)
    assert jnp.allclose(o_bf.astype(jnp.float32), e_bf, atol=2.5e-1, rtol=1e-1)

    print("KERNEL_OK")
</pallas_src>

<mosaic_0001>
module attributes {stable_mosaic.version = 11 : i64} {
  func.func @_random_transform_kernel(%arg0: i32, %arg1: i32, %arg2: memref<1x16x16xf32, #tpu.memory_space<vmem>>, %arg3: memref<1x16x16xf32, #tpu.memory_space<vmem>>, %arg4: memref<1x64x16xf32, #tpu.memory_space<vmem>>, %arg5: memref<1x4x16x16xf32, #tpu.memory_space<vmem>>) attributes {dimension_semantics = [#tpu.dimension_semantics<parallel>, #tpu.dimension_semantics<parallel>], iteration_bounds = array<i64: 2, 1>, scalar_prefetch = 0 : i64, scratch_operands = 0 : i64, tpu.core_type = #tpu.core_type<tc>, window_params = [{transform_indices = @transform_0, window_bounds = array<i64: 1, 16, 16>}, {transform_indices = @transform_1, window_bounds = array<i64: 1, 16, 16>}, {transform_indices = @transform_2, window_bounds = array<i64: 1, 64, 16>}, {transform_indices = @transform_3, window_bounds = array<i64: 1, 4, 16, 16>}]} {
    %c0 = arith.constant 0 : index
    %c0_0 = arith.constant 0 : index
    %c0_1 = arith.constant 0 : index
    %0 = vector.load %arg4[%c0, %c0_0, %c0_1] : memref<1x64x16xf32, #tpu.memory_space<vmem>>, vector<1x64x16xf32>
    %1 = vector.shape_cast %0 : vector<1x64x16xf32> to vector<64x16xf32>
    %c0_2 = arith.constant 0 : index
    %c0_3 = arith.constant 0 : index
    %c0_4 = arith.constant 0 : index
    %2 = vector.load %arg3[%c0_2, %c0_3, %c0_4] : memref<1x16x16xf32, #tpu.memory_space<vmem>>, vector<1x16x16xf32>
    %3 = vector.shape_cast %2 : vector<1x16x16xf32> to vector<16x16xf32>
    %cst = arith.constant dense<0.000000e+00> : vector<64x16xf32>
    %4 = tpu.matmul %1, %3, %cst {dimension_numbers = #tpu.dot_dimension_numbers<[1], [0], [0], [1], [0, 0, 1, 1], [], []>} : vector<64x16xf32>, vector<16x16xf32>, vector<64x16xf32> -> vector<64x16xf32>
    %5 = vector.shape_cast %4 : vector<64x16xf32> to vector<4x16x16xf32>
    %c0_5 = arith.constant 0 : index
    %c0_6 = arith.constant 0 : index
    %c0_7 = arith.constant 0 : index
    %6 = vector.load %arg2[%c0_5, %c0_6, %c0_7] : memref<1x16x16xf32, #tpu.memory_space<vmem>>, vector<1x16x16xf32>
    %7 = vector.shape_cast %6 : vector<1x16x16xf32> to vector<1x16x16xf32>
    %8 = vector.broadcast %7 : vector<1x16x16xf32> to vector<4x16x16xf32>
    "tpu.trace_start"() <{level = 10 : i32, message = "cih,chj->cij"}> : () -> ()
    %cst_8 = arith.constant dense<0.000000e+00> : vector<4x16x16xf32>
    %9 = tpu.matmul %8, %5, %cst_8 {dimension_numbers = #tpu.dot_dimension_numbers<[2], [1], [1], [2], [0, 0, 0, 1, 1, 2], [0], [0]>} : vector<4x16x16xf32>, vector<4x16x16xf32>, vector<4x16x16xf32> -> vector<4x16x16xf32>
    "tpu.trace_stop"() : () -> ()
    %c0_9 = arith.constant 0 : index
    %c0_10 = arith.constant 0 : index
    %c0_11 = arith.constant 0 : index
    %c0_12 = arith.constant 0 : index
    %10 = vector.load %arg5[%c0_9, %c0_10, %c0_11, %c0_12] : memref<1x4x16x16xf32, #tpu.memory_space<vmem>>, vector<1x4x16x16xf32>
    %11 = vector.shape_cast %10 : vector<1x4x16x16xf32> to vector<4x16x16xf32>
    %12 = vector.shape_cast %9 : vector<4x16x16xf32> to vector<1x4x16x16xf32>
    tpu.vector_store %arg5[%c0_9, %c0_10, %c0_11, %c0_12], %12 {strides = array<i32>} : memref<1x4x16x16xf32, #tpu.memory_space<vmem>>, vector<1x4x16x16xf32>,
    return
  }
  func.func @transform_0(%arg0: i32, %arg1: i32) -> (i32, i32, i32) {
    %c0_i32 = arith.constant 0 : i32
    %c0_i32_0 = arith.constant 0 : i32
    %c0_i32_1 = arith.constant 0 : i32
    return %arg0, %c0_i32, %c0_i32_0 : i32, i32, i32
  }
  func.func @transform_1(%arg0: i32, %arg1: i32) -> (i32, i32, i32) {
    %c0_i32 = arith.constant 0 : i32
    %c0_i32_0 = arith.constant 0 : i32
    %c0_i32_1 = arith.constant 0 : i32
    return %arg0, %c0_i32, %c0_i32_0 : i32, i32, i32
  }
  func.func @transform_2(%arg0: i32, %arg1: i32) -> (i32, i32, i32) {
    %c0_i32 = arith.constant 0 : i32
    %c0_i32_0 = arith.constant 0 : i32
    return %arg0, %arg1, %c0_i32 : i32, i32, i32
  }
  func.func @transform_3(%arg0: i32, %arg1: i32) -> (i32, i32, i32, i32) {
    %c0_i32 = arith.constant 0 : i32
    %c0_i32_0 = arith.constant 0 : i32
    %c0_i32_1 = arith.constant 0 : i32
    return %arg0, %arg1, %c0_i32, %c0_i32_0 : i32, i32, i32, i32
  }
}

</mosaic_0001>

<llo_original>
// kernel: tpu_custom_call.1
$region0: #{tpu_custom_call.1}
  #allocation0 [shape = 'u32[]', space=smem, size = 0x4, offset = 0x4, fixed_abs, tag = 'smem constant byte address 0x4 - core index']
  #allocation1 [shape = 'u32[72,128]{1,0:T(1,128)}', space=vmem, size = 0x9000, scoped, tag = 'internal scratch']
  %s0 = inlined_call_operand.vmem [shape: f32[2,16,16], index: 0, kind: input, shape index: {}]
  %s1 = inlined_call_operand.vmem [shape: f32[2,16,16], index: 1, kind: input, shape index: {}]
  %s2 = inlined_call_operand.vmem [shape: f32[2,64,16], index: 2, kind: input, shape index: {}]
  %s3 = inlined_call_operand.hbm [shape: f32[2,4,16,16], index: 3, kind: output, shape index: {}]
  %s4 = sld [smem:[#allocation0]]
  $region45: #{tpu_custom_call.1} parent=0
    _
  %s6 = ssub.s32 1, %s4
  %s7 = scalar_select 0, %s6, %s4
  $region1: #{tpu_custom_call.1} parent=0
    #allocation2 [shape = 'u8[65536]{0}', space=vmem, size = 0x10000, scoped, tag = 'output window, operand 0']
    #allocation3 [shape = 's32[2]{0}', space=sflag, size = 0x8, scoped, tag = 'scoped memory for tpu_custom_call.1']
    %8 = vsyncpa [#allocation3], 0
    %s9 = scalar_lea.sflag [#allocation3], 1
    %10 = vsyncpa %s9, 0
    loop: start=0, step=1, limit=4
    $region2: #{tpu_custom_call.1} parent=1 // loop_pre_header
      _
    $region3: #{tpu_custom_call.1} parent=1 // loop_header
      %s12 = sphi 0, %s16
      %p13 = scmp.ge.s32.totalorder %s12, 4
      %s19 = sphi 0, %s31
      %s20 = sphi 0, %s27
      %s21 = sphi 0, %s19
      %s22 = sphi 0, %s20
      %s23 = sphi 0, %s21
      %s24 = sphi 0, %s22
      %s34 = sphi 0, %s36
      %s37 = sphi 0, %s34
      %s38 = sphi 0, %s37
      %s54 = sphi 0, %s38
      %s60 = sphi 0, %s62
      %s63 = sphi 0, %s60
      %s64 = sphi 0, %s63
      %s80 = sphi 0, %s64
      %s88 = sphi 0, %s90
      %s91 = sphi 0, %s88
      %s92 = sphi 0, %s91
      %s108 = sphi 0, %s92
      %s116 = sphi 0, %s118
      %s119 = sphi 0, %s116
      %s120 = sphi 0, %s119
      %s136 = sphi 0, %s120
    $region4: #{tpu_custom_call.1} parent=1 // loop_header_branch
      %15 = sbr.rel (%p13) target = $region8
    $region5: #{tpu_custom_call.1} parent=1 // loop_body
      %s17 = ssub.s32 %s12, 1
      %s18 = ssub.s32 %s12, 2
      %s25 = sadd.s32 1, %s20
      %p26 = scmp.ge.s32.totalorder %s25, 1
      %s27 = scalar_select %p26, 0, %s25
      %s28 = sadd.s32 1, %s19
      %s29 = scalar_select %p26, %s28, %s19
      %p30 = scmp.ge.s32.totalorder %s29, 2
      %s31 = scalar_select %p30, 0, %s29
      %s32 = ssub.s32 %s19, %s31
      %p33 = scmp.eq.s32.totalorder %s32, 0
      %s35 = sadd.s32 %s34, 1
      %s36 = scalar_select %p33, %s34, %s35
      %p39 = pneg %p33
      %p40 = scmp.eq.s32.totalorder %s12, 1
      %p41 = por %p39, %p40
      %p42 = scmp.ne.s32.totalorder %s34, %s37
      %p43 = scmp.eq.s32.totalorder %s12, 0
      %p44 = por %p42, %p43
      %p45 = scmp.ne.s32.totalorder %s34, %s37
      %p46 = scmp.eq.s32.totalorder %s17, 1
      %p47 = por %p45, %p46
      %p48 = scmp.ne.s32.totalorder %s37, %s38
      %p49 = scmp.eq.s32.totalorder %s17, 0
      %p50 = por %p48, %p49
      %p51 = scmp.ne.s32.totalorder %s37, %s38
      %p52 = scmp.eq.s32.totalorder %s18, 1
      %p53 = por %p51, %p52
      %p55 = scmp.ne.s32.totalorder %s38, %s54
      %p56 = scmp.eq.s32.totalorder %s18, 0
      %p57 = por %p55, %p56
      %s58 = ssub.s32 %s19, %s31
      %p59 = scmp.eq.s32.totalorder %s58, 0
      %s61 = sadd.s32 %s60, 1
      %s62 = scalar_select %p59, %s60, %s61
      %p65 = pneg %p59
      %p66 = scmp.eq.s32.totalorder %s12, 1
      %p67 = por %p65, %p66
      %p68 = scmp.ne.s32.totalorder %s60, %s63
      %p69 = scmp.eq.s32.totalorder %s12, 0
      %p70 = por %p68, %p69
      %p71 = scmp.ne.s32.totalorder %s60, %s63
      %p72 = scmp.eq.s32.totalorder %s17, 1
      %p73 = por %p71, %p72
      %p74 = scmp.ne.s32.totalorder %s63, %s64
      %p75 = scmp.eq.s32.totalorder %s17, 0
      %p76 = por %p74, %p75
      %p77 = scmp.ne.s32.totalorder %s63, %s64
      %p78 = scmp.eq.s32.totalorder %s18, 1
      %p79 = por %p77, %p78
      %p81 = scmp.ne.s32.totalorder %s64, %s80
      %p82 = scmp.eq.s32.totalorder %s18, 0
      %p83 = por %p81, %p82
      %s84 = ssub.s32 %s19, %s31
      %s85 = ssub.s32 %s20, %s27
      %s86 = sor.u32 %s84, %s85
      %p87 = scmp.eq.s32.totalorder %s86, 0
      %s89 = sadd.s32 %s88, 1
      %s90 = scalar_select %p87, %s88, %s89
      %p93 = pneg %p87
      %p94 = scmp.eq.s32.totalorder %s12, 1
      %p95 = por %p93, %p94
      %p96 = scmp.ne.s32.totalorder %s88, %s91
      %p97 = scmp.eq.s32.totalorder %s12, 0
      %p98 = por %p96, %p97
      %p99 = scmp.ne.s32.totalorder %s88, %s91
      %p100 = scmp.eq.s32.totalorder %s17, 1
      %p101 = por %p99, %p100
      %p102 = scmp.ne.s32.totalorder %s91, %s92
      %p103 = scmp.eq.s32.totalorder %s17, 0
      %p104 = por %p102, %p103
      %p105 = scmp.ne.s32.totalorder %s91, %s92
      %p106 = scmp.eq.s32.totalorder %s18, 1
      %p107 = por %p105, %p106
      %p109 = scmp.ne.s32.totalorder %s92, %s108
      %p110 = scmp.eq.s32.totalorder %s18, 0
      %p111 = por %p109, %p110
      %s112 = ssub.s32 %s19, %s31
      %s113 = ssub.s32 %s20, %s27
      %s114 = sor.u32 %s112, %s113
      %p115 = scmp.eq.s32.totalorder %s114, 0
      %s117 = sadd.s32 %s116, 1
      %s118 = scalar_select %p115, %s116, %s117
      %p121 = pneg %p115
      %p122 = scmp.eq.s32.totalorder %s12, 1
      %p123 = por %p121, %p122
      %p124 = scmp.ne.s32.totalorder %s116, %s119
      %p125 = scmp.eq.s32.totalorder %s12, 0
      %p126 = por %p124, %p125
      %p127 = scmp.ne.s32.totalorder %s116, %s119
      %p128 = scmp.eq.s32.totalorder %s17, 1
      %p129 = por %p127, %p128
      %p130 = scmp.ne.s32.totalorder %s119, %s120
      %p131 = scmp.eq.s32.totalorder %s17, 0
      %p132 = por %p130, %p131
      %p133 = scmp.ne.s32.totalorder %s119, %s120
      %p134 = scmp.eq.s32.totalorder %s18, 1
      %p135 = por %p133, %p134
      %p137 = scmp.ne.s32.totalorder %s120, %s136
      %p138 = scmp.eq.s32.totalorder %s18, 0
      %p139 = por %p137, %p138
      %p140 = scmp.le.s32.totalorder 1, %s12
      %p141 = scmp.lt.s32.totalorder %s12, 3
      %p142 = pnand %p140, %p141
      %p143 = pneg %p142
      // Predicated region
      $region9: #{tpu_custom_call.1} parent=5 // pred_check
        _
      $region10: #{tpu_custom_call.1} parent=5 // pred_check_branch
        %145 = sbr.rel (%p142) target = $region12
      $region11: #{tpu_custom_call.1} parent=5 // pred_region
        %s146 = ssub.s32 %s12, 1
      $region12: #{tpu_custom_call.1} parent=5 // pred_fallthru
        _
      %p147 = scmp.lt.s32.totalorder %s12, 2
      // Predicated region
      $region13: #{tpu_custom_call.1} parent=5 // pred_check
        %p148 = pneg %p147
      $region14: #{tpu_custom_call.1} parent=5 // pred_check_branch
        %150 = sbr.rel (%p148) target = $region16
      $region15: #{tpu_custom_call.1} parent=5 // pred_region
        // Predicated region
        $region17: #{tpu_custom_call.1} parent=15 // pred_check
          %p151 = pneg %p44
        $region18: #{tpu_custom_call.1} parent=15 // pred_check_branch
          %153 = sbr.rel (%p151) target = $region20
        $region19: #{tpu_custom_call.1} parent=15 // pred_region
          %p154 = scmp.lt.s32.totalorder %s19, 1
          %s155 = scalar_select %p154, %s19, 1
          %s156 = smul.addr %s155, 2
          %s157 = smul.addr %s156, 8
          %s158 = scalar_lea.vmem %s0, %s157
        $region20: #{tpu_custom_call.1} parent=15 // pred_fallthru
          _
        // Predicated region
        $region21: #{tpu_custom_call.1} parent=15 // pred_check
          %p159 = pneg %p70
        $region22: #{tpu_custom_call.1} parent=15 // pred_check_branch
          %161 = sbr.rel (%p159) target = $region24
        $region23: #{tpu_custom_call.1} parent=15 // pred_region
          %p162 = scmp.lt.s32.totalorder %s19, 1
          %s163 = scalar_select %p162, %s19, 1
          %s164 = smul.addr %s163, 2
          %s165 = smul.addr %s164, 8
          %s166 = scalar_lea.vmem %s1, %s165
        $region24: #{tpu_custom_call.1} parent=15 // pred_fallthru
          _
        // Predicated region
        $region25: #{tpu_custom_call.1} parent=15 // pred_check
          %p167 = pneg %p98
        $region26: #{tpu_custom_call.1} parent=15 // pred_check_branch
          %169 = sbr.rel (%p167) target = $region28
        $region27: #{tpu_custom_call.1} parent=15 // pred_region
          %s170 = smul.u32 8, %s20
          %p171 = scmp.lt.s32.totalorder %s19, 1
          %s172 = scalar_select %p171, %s19, 1
          %p173 = scmp.lt.s32.totalorder %s170, 7
          %s174 = scalar_select %p173, %s170, 7
          %s175 = smul.addr %s172, 8
          %s176 = sadd.s32 %s174, %s175
          %s177 = smul.addr %s176, 8
          %s178 = scalar_lea.vmem %s2, %s177
          %s179 = smul.u32 8, %s20
        $region28: #{tpu_custom_call.1} parent=15 // pred_fallthru
          _
      $region16: #{tpu_custom_call.1} parent=5 // pred_fallthru
        _
      %p180 = scmp.le.s32.totalorder 1, %s12
      %p181 = scmp.lt.s32.totalorder %s12, 3
      %p182 = pnand %p180, %p181
      %p183 = pneg %p182
      // Predicated region
      $region29: #{tpu_custom_call.1} parent=5 // pred_check
        _
      $region30: #{tpu_custom_call.1} parent=5 // pred_check_branch
        %185 = sbr.rel (%p182) target = $region32
      $region31: #{tpu_custom_call.1} parent=5 // pred_region
        %s186 = ssub.s32 %s12, 1
        %p187 = scmp.lt.s32.totalorder %s21, 1
        %s188 = scalar_select %p187, %s21, 1
        %s189 = smul.addr %s188, 2
        %s190 = smul.addr %s189, 8
        %s191 = scalar_lea.vmem %s0, %s190
        %p192 = pneg %p50
        %p193 = pneg %p47
        %p194 = scmp.lt.s32.totalorder %s21, 1
        %s195 = scalar_select %p194, %s21, 1
        %s196 = smul.addr %s195, 2
        %s197 = smul.addr %s196, 8
        %s198 = scalar_lea.vmem %s1, %s197
        %p199 = pneg %p76
        %p200 = pneg %p73
        %s201 = smul.u32 8, %s22
        %p202 = scmp.lt.s32.totalorder %s21, 1
        %s203 = scalar_select %p202, %s21, 1
        %p204 = scmp.lt.s32.totalorder %s201, 7
        %s205 = scalar_select %p204, %s201, 7
        %s206 = smul.addr %s203, 8
        %s207 = sadd.s32 %s205, %s206
        %s208 = smul.addr %s207, 8
        %s209 = scalar_lea.vmem %s2, %s208
        %p210 = pneg %p104
        %p211 = pneg %p101
        %p212 = pneg %p132
        %p213 = pneg %p129
        %s214 = sand.u32 %s119, 1
        %s215 = scalar_lea.sflag [#allocation3], %s214
        %s216 = sand.u32 %s119, 1
        %s217 = smul.addr %s216, 64
        %s218 = scalar_lea.vmem [#allocation2], %s217
        %p219 = scmp.lt.s32.totalorder %s21, 1
        %s220 = scalar_select %p219, %s21, 1
        %s221 = smul.addr %s220, 2
        %s222 = smul.addr %s221, 8
        %s223 = scalar_lea.vmem %s0, %s222
        %p224 = scmp.lt.s32.totalorder %s21, 1
        %s225 = scalar_select %p224, %s21, 1
        %s226 = smul.addr %s225, 2
        %s227 = smul.addr %s226, 8
        %s228 = scalar_lea.vmem %s1, %s227
        %s229 = smul.u32 8, %s22
        %p230 = scmp.lt.s32.totalorder %s21, 1
        %s231 = scalar_select %p230, %s21, 1
        %p232 = scmp.lt.s32.totalorder %s229, 7
        %s233 = scalar_select %p232, %s229, 7
        %s234 = smul.addr %s231, 8
        %s235 = sadd.s32 %s233, %s234
        %s236 = smul.addr %s235, 8
        %s237 = scalar_lea.vmem %s2, %s236
        %s238 = smul.u32 8, %s22
        %s239 = smul.u32 4, %s22
        %v240 = vld [vmem:[%s237] sm:$0xff]
        %v241 = vld [vmem:[%s237 + $0x8] sm:$0xff]
        %v242 = vld [vmem:[%s237 + $0x10] sm:$0xff]
        %v243 = vld [vmem:[%s237 + $0x18] sm:$0xff]
        %v244 = vld [vmem:[%s237 + $0x20] sm:$0xff]
        %v245 = vld [vmem:[%s237 + $0x28] sm:$0xff]
        %v246 = vld [vmem:[%s237 + $0x30] sm:$0xff]
        %v247 = vld [vmem:[%s237 + $0x38] sm:$0xff]
        %v248 = vld [vmem:[%s228] sm:$0xff]
        %v249 = vld [vmem:[%s228 + $0x8] sm:$0xff]
        %vm250 = vcmask 130048
        %v252 = vsel %vm250, %v240, 0
        %v255 = vsel %vm250, %v241, 0
        %v258 = vsel %vm250, %v242, 0
        %v261 = vsel %vm250, %v243, 0
        %v264 = vsel %vm250, %v244, 0
        %v267 = vsel %vm250, %v245, 0
        %v270 = vsel %vm250, %v246, 0
        %v273 = vsel %vm250, %v247, 0
        %275 = vmatpush.msra.mxu0 0.0
        %276 = vmatpush.msra.mxu0 0.0
        %277 = vmatpush.msra.mxu0 0.0
        %278 = vmatpush.msra.mxu0 0.0
        %279 = vmatpush.msra.mxu0 0.0
        %280 = vmatpush.msra.mxu0 0.0
        %281 = vmatpush.msra.mxu0 0.0
        %282 = vmatpush.msra.mxu0 0.0
        %283 = vmatpush.msra.mxu0 0.0
        %284 = vmatpush.msra.mxu0 0.0
        %285 = vmatpush.msra.mxu0 0.0
        %286 = vmatpush.msra.mxu0 0.0
        %287 = vmatpush.msra.mxu0 0.0
        %288 = vmatpush.msra.mxu0 0.0
        %289 = vmatpush.msra.mxu0 %v249
        %290 = vmatpush.msra.mxu0 %v248
        %291 = vmatmul.f32.gmra.mxu0 %v252
        %v292 = vpop.f32.mrf.mxu0
        %v293 = vadd.f32 0.0, %v292
        %294 = vmatmul.f32.gmra.mxu0 %v255
        %v295 = vpop.f32.mrf.mxu0
        %v296 = vadd.f32 0.0, %v295
        %297 = vmatmul.f32.gmra.mxu0 %v258
        %v298 = vpop.f32.mrf.mxu0
        %v299 = vadd.f32 0.0, %v298
        %300 = vmatmul.f32.gmra.mxu0 %v261
        %v301 = vpop.f32.mrf.mxu0
        %v302 = vadd.f32 0.0, %v301
        %303 = vmatmul.f32.gmra.mxu0 %v264
        %v304 = vpop.f32.mrf.mxu0
        %v305 = vadd.f32 0.0, %v304
        %306 = vmatmul.f32.gmra.mxu0 %v267
        %v307 = vpop.f32.mrf.mxu0
        %v308 = vadd.f32 0.0, %v307
        %309 = vmatmul.f32.gmra.mxu0 %v270
        %v310 = vpop.f32.mrf.mxu0
        %v311 = vadd.f32 0.0, %v310
        %312 = vmatmul.f32.gmra.mxu0 %v273
        %v313 = vpop.f32.mrf.mxu0
        %v314 = vadd.f32 0.0, %v313
        %315 = vdwg.mxu0
        %v316 = vld [vmem:[%s223] sm:$0xff]
        %v317 = vld [vmem:[%s223 + $0x8] sm:$0xff]
        %v319 = vsel %vm250, %v316, 0
        %v322 = vsel %vm250, %v317, 0
        %324 = vmatpush.msra.mxu0 0.0
        %325 = vmatpush.msra.mxu0 0.0
        %326 = vmatpush.msra.mxu0 0.0
        %327 = vmatpush.msra.mxu0 0.0
        %328 = vmatpush.msra.mxu0 0.0
        %329 = vmatpush.msra.mxu0 0.0
        %330 = vmatpush.msra.mxu0 0.0
        %331 = vmatpush.msra.mxu0 0.0
        %332 = vmatpush.msra.mxu0 0.0
        %333 = vmatpush.msra.mxu0 0.0
        %334 = vmatpush.msra.mxu0 0.0
        %335 = vmatpush.msra.mxu0 0.0
        %336 = vmatpush.msra.mxu0 0.0
        %337 = vmatpush.msra.mxu0 0.0
        %338 = vmatpush.msra.mxu0 %v296
        %339 = vmatpush.msra.mxu0 %v293
        %340 = vmatmul.f32.gmra.mxu0 %v319
        %v341 = vpop.f32.mrf.mxu0
        %v342 = vadd.f32 0.0, %v341
        %343 = vmatmul.f32.gmra.mxu0 %v322
        %v344 = vpop.f32.mrf.mxu0
        %v345 = vadd.f32 0.0, %v344
        %346 = vdwg.mxu0
        %347 = vmatpush.msra.mxu0 0.0
        %348 = vmatpush.msra.mxu0 0.0
        %349 = vmatpush.msra.mxu0 0.0
        %350 = vmatpush.msra.mxu0 0.0
        %351 = vmatpush.msra.mxu0 0.0
        %352 = vmatpush.msra.mxu0 0.0
        %353 = vmatpush.msra.mxu0 0.0
        %354 = vmatpush.msra.mxu0 0.0
        %355 = vmatpush.msra.mxu0 0.0
        %356 = vmatpush.msra.mxu0 0.0
        %357 = vmatpush.msra.mxu0 0.0
        %358 = vmatpush.msra.mxu0 0.0
        %359 = vmatpush.msra.mxu0 0.0
        %360 = vmatpush.msra.mxu0 0.0
        %361 = vmatpush.msra.mxu0 %v302
        %362 = vmatpush.msra.mxu0 %v299
        %363 = vmatmul.f32.gmra.mxu0 %v319
        %v364 = vpop.f32.mrf.mxu0
        %v365 = vadd.f32 0.0, %v364
        %366 = vmatmul.f32.gmra.mxu0 %v322
        %v367 = vpop.f32.mrf.mxu0
        %v368 = vadd.f32 0.0, %v367
        %369 = vdwg.mxu0
        %370 = vmatpush.msra.mxu0 0.0
        %371 = vmatpush.msra.mxu0 0.0
        %372 = vmatpush.msra.mxu0 0.0
        %373 = vmatpush.msra.mxu0 0.0
        %374 = vmatpush.msra.mxu0 0.0
        %375 = vmatpush.msra.mxu0 0.0
        %376 = vmatpush.msra.mxu0 0.0
        %377 = vmatpush.msra.mxu0 0.0
        %378 = vmatpush.msra.mxu0 0.0
        %379 = vmatpush.msra.mxu0 0.0
        %380 = vmatpush.msra.mxu0 0.0
        %381 = vmatpush.msra.mxu0 0.0
        %382 = vmatpush.msra.mxu0 0.0
        %383 = vmatpush.msra.mxu0 0.0
        %384 = vmatpush.msra.mxu0 %v308
        %385 = vmatpush.msra.mxu0 %v305
        %386 = vmatmul.f32.gmra.mxu0 %v319
        %v387 = vpop.f32.mrf.mxu0
        %v388 = vadd.f32 0.0, %v387
        %389 = vmatmul.f32.gmra.mxu0 %v322
        %v390 = vpop.f32.mrf.mxu0
        %v391 = vadd.f32 0.0, %v390
        %392 = vdwg.mxu0
        %393 = vmatpush.msra.mxu0 0.0
        %394 = vmatpush.msra.mxu0 0.0
        %395 = vmatpush.msra.mxu0 0.0
        %396 = vmatpush.msra.mxu0 0.0
        %397 = vmatpush.msra.mxu0 0.0
        %398 = vmatpush.msra.mxu0 0.0
        %399 = vmatpush.msra.mxu0 0.0
        %400 = vmatpush.msra.mxu0 0.0
        %401 = vmatpush.msra.mxu0 0.0
        %402 = vmatpush.msra.mxu0 0.0
        %403 = vmatpush.msra.mxu0 0.0
        %404 = vmatpush.msra.mxu0 0.0
        %405 = vmatpush.msra.mxu0 0.0
        %406 = vmatpush.msra.mxu0 0.0
        %407 = vmatpush.msra.mxu0 %v314
        %408 = vmatpush.msra.mxu0 %v311
        %409 = vmatmul.f32.gmra.mxu0 %v319
        %v410 = vpop.f32.mrf.mxu0
        %v411 = vadd.f32 0.0, %v410
        %412 = vmatmul.f32.gmra.mxu0 %v322
        %v413 = vpop.f32.mrf.mxu0
        %v414 = vadd.f32 0.0, %v413
        %415 = vdwg.mxu0
        %416 = vst.msk [vmem:[%s218] sm:$0xff] %vm250, %v342
        %417 = vst.msk [vmem:[%s218 + $0x8] sm:$0xff] %vm250, %v345
        %418 = vst.msk [vmem:[%s218 + $0x10] sm:$0xff] %vm250, %v365
        %419 = vst.msk [vmem:[%s218 + $0x18] sm:$0xff] %vm250, %v368
        %420 = vst.msk [vmem:[%s218 + $0x20] sm:$0xff] %vm250, %v388
        %421 = vst.msk [vmem:[%s218 + $0x28] sm:$0xff] %vm250, %v391
        %422 = vst.msk [vmem:[%s218 + $0x30] sm:$0xff] %vm250, %v411
        %423 = vst.msk [vmem:[%s218 + $0x38] sm:$0xff] %vm250, %v414
        %s424 = sand.u32 %s119, 1
        %s425 = scalar_lea.sflag [#allocation3], %s424
        %s426 = sand.u32 %s119, 1
        %s427 = smul.addr %s426, 64
        %s428 = scalar_lea.vmem [#allocation2], %s427
        // Predicated region
        $region33: #{tpu_custom_call.1} parent=31 // pred_check
          %p429 = pneg %p129
        $region34: #{tpu_custom_call.1} parent=31 // pred_check_branch
          %431 = sbr.rel (%p429) target = $region36
        $region35: #{tpu_custom_call.1} parent=31 // pred_region
          %s432 = smul.u32 4, %s22
          %434 = vsyncadd %s425, 0
          %s435 = smul.addr %s432, 2
          %s436 = smul.addr %s21, 8
          %s437 = sadd.s32 %s435, %s436
          %s438 = smul.addr %s437, 8
          %s439 = scalar_lea.hbm %s3, %s438
          %s440 = sshll.u32 %s428, 4
          %s441 = int_to_ptr.vmem [resolvable:$true] %s440
          %s442 = sshll.u32 %s439, 4
          %s443 = int_to_ptr.hbm [resolvable:$true] %s442
          %448 = dma.vmem_to_hbm [thread:$0]  %s441, 1024, %s443, %s425, 128, 128, 8
        $region36: #{tpu_custom_call.1} parent=31 // pred_fallthru
          _
      $region32: #{tpu_custom_call.1} parent=5 // pred_fallthru
        _
      %p449 = scmp.le.s32.totalorder 2, %s12
      // Predicated region
      $region37: #{tpu_custom_call.1} parent=5 // pred_check
        %p450 = pneg %p449
      $region38: #{tpu_custom_call.1} parent=5 // pred_check_branch
        %452 = sbr.rel (%p450) target = $region40
      $region39: #{tpu_custom_call.1} parent=5 // pred_region
        %s453 = ssub.s32 %s12, 2
        // Predicated region
        $region41: #{tpu_custom_call.1} parent=39 // pred_check
          %p454 = pneg %p135
        $region42: #{tpu_custom_call.1} parent=39 // pred_check_branch
          %456 = sbr.rel (%p454) target = $region44
        $region43: #{tpu_custom_call.1} parent=39 // pred_region
          %s457 = sand.u32 %s120, 1
          %s458 = scalar_lea.sflag [#allocation3], %s457
          %s459 = sand.u32 %s120, 1
          %s460 = smul.addr %s459, 64
          %s461 = scalar_lea.vmem [#allocation2], %s460
          %463 = dma.done %s458, 1024
        $region44: #{tpu_custom_call.1} parent=39 // pred_fallthru
          _
      $region40: #{tpu_custom_call.1} parent=5 // pred_fallthru
        _
    $region6: #{tpu_custom_call.1} parent=1 // loop_footer
      %s16 = sadd.s32 1, %s12
    $region7: #{tpu_custom_call.1} parent=1 // loop_footer_branch
      %11 = sbr.rel target = $region3
    $region8: #{tpu_custom_call.1} parent=1 // loop_exit
      _
    %464 = vsyncpa [#allocation3], 1
    %s465 = scalar_lea.sflag [#allocation3], 1
    %466 = vsyncpa %s465, 1

</llo_original>
